<compile_context>
chip_gen: v6e
topology: v6e:2x2x1
jax: 0.10.0
libtpu: 0.0.40
codegen_flags: <defaults>
</compile_context>

<pallas_src>
import jax
import jax.numpy as jnp
from jax.experimental import pallas as pl
from jax.experimental.pallas import tpu as pltpu

_LANE = 128


def _mish_kernel(x_ref, o_ref):
    x = x_ref[...].astype(jnp.float32)
    # mish(x) = x * tanh(softplus(x)).  With t = e^x:
    #   tanh(log(1 + t)) = t(t+2) / (t(t+2) + 2)
    # -> one exp + one reciprocal instead of exp + log1p + tanh.
    # min(x, 20) keeps exp overflow-safe; for x >= 20 the ratio is 1.0 to
    # within 1 ulp, so no extra select is needed.
    t = jnp.exp(jnp.minimum(x, 20.0))
    u = t * (t + 2.0)
    y = x * u * pl.reciprocal(u + 2.0, approx=False)
    o_ref[...] = y.astype(o_ref.dtype)


def _tpu_generation():
    """Best-effort TPU generation detection; None -> conservative defaults."""
    try:
        kind = jax.devices()[0].device_kind.lower()
    except Exception:
        return None
    if "v5 lite" in kind or "v5e" in kind or "v5lite" in kind:
        return "v5e"
    if "v6" in kind:
        return "v6e"
    if "v7" in kind:
        return "v7x"
    return None


def _sublane_rows(dtype):
    # Native sublane granule: 8 rows for 4-byte, 16 for 2-byte, 32 for 1-byte.
    itemsize = jnp.dtype(dtype).itemsize
    return max(8, 8 * (4 // max(1, itemsize)))


def _mish_2d(x2d, block_rows, gen, vmem_limit):
    rows, lanes = x2d.shape
    grid = (pl.cdiv(rows, block_rows),)
    n_elems = rows * lanes
    itemsize = jnp.dtype(x2d.dtype).itemsize
    cost = pl.CostEstimate(
        flops=7 * n_elems,
        transcendentals=2 * n_elems,          # exp + reciprocal per element
        bytes_accessed=2 * n_elems * itemsize,  # streamed in + out once
    )

    def build(dim_sem):
        return pl.pallas_call(
            _mish_kernel,
            out_shape=jax.ShapeDtypeStruct(x2d.shape, x2d.dtype),
            grid=grid,
            in_specs=[pl.BlockSpec((block_rows, lanes), lambda i: (i, 0))],
            out_specs=pl.BlockSpec((block_rows, lanes), lambda i: (i, 0)),
            compiler_params=pltpu.CompilerParams(
                dimension_semantics=dim_sem,
                vmem_limit_bytes=vmem_limit,
            ),
            cost_estimate=cost,
        )

    # v7x: split the streaming grid across both TensorCores (each has its own
    # DMA path + EUP). Only CORE_PARALLEL changes codegen; plain "parallel"
    # is a no-op for this. Fall back gracefully if the lowering rejects it.
    if gen == "v7x" and grid[0] >= 2:
        try:
            return build((pltpu.CORE_PARALLEL,))(x2d)
        except Exception:
            pass
    return build((pltpu.PARALLEL,))(x2d)


def mish(x):
    """Mish activation, elementwise, any shape / float dtype."""
    orig_shape = x.shape
    orig_dtype = x.dtype
    n = x.size
    if n == 0:
        return x

    itemsize = jnp.dtype(orig_dtype).itemsize
    sublane = _sublane_rows(orig_dtype)
    tile = sublane * _LANE

    x_flat = jnp.ravel(x)  # metadata-only for contiguous inputs
    if n % _LANE == 0:
        # Fast path: no pad-concatenate, no post-slice -> no extra HBM copies.
        # rows need not be a multiple of the sublane granule: the block is
        # either full-extent or a sublane multiple with a masked ragged tail.
        n_pad = n
    else:
        n_pad = ((n + tile - 1) // tile) * tile
        x_flat = jnp.concatenate(
            [x_flat, jnp.zeros((n_pad - n,), dtype=orig_dtype)]
        )

    rows = n_pad // _LANE

    gen = _tpu_generation()
    # Block / VMEM budget per generation:
    #   v5e  : 3 MiB blocks, 4x double-buffered = 12 MiB (limit raised to 24).
    #   v6e  : 8 MiB blocks, 32 MiB buffered, limit 48 MiB (128 MiB physical).
    #   v7x  : 8 MiB blocks, 32 MiB buffered, limit 40 MiB (64 MiB physical).
    #   other: conservative 2 MiB, default scoped limit.
    block_bytes = {"v5e": 3 << 20, "v6e": 8 << 20, "v7x": 8 << 20}.get(gen, 2 << 20)
    vmem_limit = {"v5e": 24 << 20, "v6e": 48 << 20, "v7x": 40 << 20}.get(gen, None)

    target_rows = max(sublane, block_bytes // (_LANE * itemsize))
    target_rows = (target_rows // sublane) * sublane
    block_rows = rows if rows <= target_rows else target_rows

    x2d = x_flat.reshape(rows, _LANE)
    out2d = _mish_2d(x2d, block_rows, gen, vmem_limit)

    out_flat = out2d.reshape(-1)
    if n_pad != n:
        out_flat = out_flat[:n]
    return out_flat.reshape(orig_shape)


def _mish_ref(x):
    xf = x.astype(jnp.float32)
    sp = jnp.where(xf > 20.0, xf, jnp.log1p(jnp.exp(jnp.minimum(xf, 20.0))))
    return (xf * jnp.tanh(sp)).astype(x.dtype)


if __name__ == "__main__":
    key = jax.random.PRNGKey(0)

    # NCHW input, as the PyTorch module would receive from a conv stack.
    # 2*4*16*16 = 2048 elements -> exercises the aligned no-copy fast path.
    x = jax.random.normal(key, (2, 4, 16, 16), dtype=jnp.float32) * 3.0
    y = jax.block_until_ready(mish(x))
    assert y.shape == x.shape and y.dtype == x.dtype
    assert jnp.allclose(y, _mish_ref(x), atol=1e-5, rtol=1e-5)

    # Small unaligned input -> exercises the padded path.
    x2 = jax.random.normal(jax.random.PRNGKey(1), (3, 5, 7, 11), dtype=jnp.float32) * 3.0
    y2 = jax.block_until_ready(mish(x2))
    assert y2.shape == x2.shape and y2.dtype == x2.dtype
    assert jnp.allclose(y2, _mish_ref(x2), atol=1e-5, rtol=1e-5)

    # bf16 input -> exercises the dtype-aware (16,128) tiling.
    x3 = (jax.random.normal(jax.random.PRNGKey(2), (2, 8, 16, 16), dtype=jnp.float32) * 3.0
          ).astype(jnp.bfloat16)
    y3 = jax.block_until_ready(mish(x3))
    assert y3.shape == x3.shape and y3.dtype == x3.dtype
    assert jnp.allclose(y3.astype(jnp.float32), _mish_ref(x3).astype(jnp.float32),
                        atol=2e-2, rtol=2e-2)

    # Empty tensor -> early return, no kernel launch.
    x4 = jnp.zeros((0, 4), dtype=jnp.float32)
    y4 = jax.block_until_ready(mish(x4))
    assert y4.shape == x4.shape

    print("KERNEL_OK")
</pallas_src>

<mosaic_0001>
module attributes {stable_mosaic.version = 11 : i64} {
  func.func @_mish_kernel(%arg0: i32, %arg1: memref<16x128xf32, #tpu.memory_space<vmem>>, %arg2: memref<16x128xf32, #tpu.memory_space<vmem>>) attributes {dimension_semantics = [#tpu.dimension_semantics<parallel>], iteration_bounds = array<i64: 1>, scalar_prefetch = 0 : i64, scratch_operands = 0 : i64, tpu.core_type = #tpu.core_type<tc>, window_params = [{transform_indices = @transform_0, window_bounds = array<i64: 16, 128>}, {transform_indices = @transform_1, window_bounds = array<i64: 16, 128>}]} {
    %c0 = arith.constant 0 : index
    %c0_0 = arith.constant 0 : index
    %0 = vector.load %arg1[%c0, %c0_0] : memref<16x128xf32, #tpu.memory_space<vmem>>, vector<16x128xf32>
    %cst = arith.constant 2.000000e+01 : f32
    %1 = vector.broadcast %cst : f32 to vector<16x128xf32>
    %2 = arith.minimumf %0, %1 : vector<16x128xf32>
    %3 = math.exp %2 : vector<16x128xf32>
    %cst_1 = arith.constant 2.000000e+00 : f32
    %4 = vector.broadcast %cst_1 : f32 to vector<16x128xf32>
    %5 = arith.addf %3, %4 : vector<16x128xf32>
    %6 = arith.mulf %3, %5 : vector<16x128xf32>
    %7 = arith.mulf %0, %6 : vector<16x128xf32>
    %cst_2 = arith.constant 2.000000e+00 : f32
    %8 = vector.broadcast %cst_2 : f32 to vector<16x128xf32>
    %9 = arith.addf %6, %8 : vector<16x128xf32>
    %10 = tpu.reciprocal %9 : vector<16x128xf32> -> vector<16x128xf32>
    %11 = arith.mulf %7, %10 : vector<16x128xf32>
    %c0_3 = arith.constant 0 : index
    %c0_4 = arith.constant 0 : index
    %12 = vector.load %arg2[%c0_3, %c0_4] : memref<16x128xf32, #tpu.memory_space<vmem>>, vector<16x128xf32>
    tpu.vector_store %arg2[%c0_3, %c0_4], %11 {strides = array<i32>} : memref<16x128xf32, #tpu.memory_space<vmem>>, vector<16x128xf32>,
    return
  }
  func.func @transform_0(%arg0: i32) -> (i32, i32) {
    %c0_i32 = arith.constant 0 : i32
    %c0_i32_0 = arith.constant 0 : i32
    return %arg0, %c0_i32 : i32, i32
  }
  func.func @transform_1(%arg0: i32) -> (i32, i32) {
    %c0_i32 = arith.constant 0 : i32
    %c0_i32_0 = arith.constant 0 : i32
    return %arg0, %c0_i32 : i32, i32
  }
}

</mosaic_0001>

<llo_original>
// kernel: tpu_custom_call.1
$region0: #{tpu_custom_call.1}
  #allocation0 [shape = 'u32[]', space=smem, size = 0x4, offset = 0x4, fixed_abs, tag = 'smem constant byte address 0x4 - core index']
  #allocation1 [shape = 'u32[144,128]{1,0:T(1,128)}', space=vmem, size = 0x12000, scoped, tag = 'internal scratch']
  %s0 = inlined_call_operand.hbm [shape: f32[16,128], index: 0, kind: input, shape index: {}]
  %s1 = inlined_call_operand.hbm [shape: f32[16,128], index: 1, kind: output, shape index: {}]
  %s2 = sld [smem:[#allocation0]]
  $region18: #{tpu_custom_call.1} parent=0
    _
  %s4 = ssub.s32 1, %s2
  %s5 = scalar_select 0, %s4, %s2
  $region1: #{tpu_custom_call.1} parent=0
    #allocation2 [shape = 'u8[8192]{0}', space=vmem, size = 0x2000, scoped, tag = 'input window, operand 0, single buffered']
    #allocation3 [shape = 's32[1]{0}', space=sflag, size = 0x4, scoped, tag = 'scoped memory for tpu_custom_call.1']
    #allocation4 [shape = 's32[1]{0}', space=sflag, size = 0x4, scoped, tag = 'scoped memory for tpu_custom_call.1']
    #allocation5 [shape = 'u8[8192]{0}', space=vmem, size = 0x2000, scoped, tag = 'output window, operand 0, single buffered']
    %6 = vsyncpa [#allocation3], 0
    %7 = vsyncpa [#allocation4], 0
    // Predicated region
    $region2: #{tpu_custom_call.1} parent=1 // pred_check
      _
    $region3: #{tpu_custom_call.1} parent=1 // pred_check_branch
      %9 = sbr.rel (0) target = $region5
    $region4: #{tpu_custom_call.1} parent=1 // pred_region
      %s11 = ssub.s32 256, 256
      %12 = vsyncadd [#allocation3], %s11
      %s13 = sshll.u32 [#allocation2], 4
      %s14 = int_to_ptr.vmem [resolvable:$true] %s13
      %19 = dma.hbm_to_vmem [thread:$0]  %s0, 256, %s14, [#allocation3], 128, 128, 8
    $region5: #{tpu_custom_call.1} parent=1 // pred_fallthru
      _
    // Predicated region
    $region6: #{tpu_custom_call.1} parent=1 // pred_check
      _
    $region7: #{tpu_custom_call.1} parent=1 // pred_check_branch
      %21 = sbr.rel (0) target = $region9
    $region8: #{tpu_custom_call.1} parent=1 // pred_region
      %22 = dma.done [#allocation3], 256
    $region9: #{tpu_custom_call.1} parent=1 // pred_fallthru
      _
    %v23 = vld [vmem:[#allocation2] sm:$0xff]
    %v24 = vld [vmem:[#allocation2 + $0x8] sm:$0xff]
    %v25 = vmin.f32 %v23, 20.0
    %v26 = vmin.f32 %v24, 20.0
    %v27 = vmul.f32 %v25, 1.442695
    %v28 = vpow.pop %v27
    %v29 = vmul.f32 %v26, 1.442695
    %v30 = vpow.pop %v29
    %v31 = vadd.f32 %v28, 2.0
    %v32 = vadd.f32 %v30, 2.0
    %v33 = vmul.f32 %v28, %v31
    %v34 = vmul.f32 %v30, %v32
    %v35 = vmul.f32 %v23, %v33
    %v36 = vmul.f32 %v24, %v34
    %v37 = vadd.f32 %v33, 2.0
    %v38 = vadd.f32 %v34, 2.0
    %v39 = vrcp.pop %v37
    %v40 = vrcp.pop %v38
    %v41 = vmul.f32 %v35, %v39
    %v42 = vmul.f32 %v36, %v40
    %43 = vst [vmem:[#allocation5] sm:$0xff] %v41
    %44 = vst [vmem:[#allocation5 + $0x8] sm:$0xff] %v42
    // Predicated region
    $region10: #{tpu_custom_call.1} parent=1 // pred_check
      _
    $region11: #{tpu_custom_call.1} parent=1 // pred_check_branch
      %46 = sbr.rel (0) target = $region13
    $region12: #{tpu_custom_call.1} parent=1 // pred_region
      %s48 = ssub.s32 256, 256
      %49 = vsyncadd [#allocation4], %s48
      %s50 = sshll.u32 [#allocation5], 4
      %s51 = int_to_ptr.vmem [resolvable:$true] %s50
      %56 = dma.vmem_to_hbm [thread:$0]  %s51, 256, %s1, [#allocation4], 128, 128, 8
    $region13: #{tpu_custom_call.1} parent=1 // pred_fallthru
      _
    // Predicated region
    $region14: #{tpu_custom_call.1} parent=1 // pred_check
      _
    $region15: #{tpu_custom_call.1} parent=1 // pred_check_branch
      %58 = sbr.rel (0) target = $region17
    $region16: #{tpu_custom_call.1} parent=1 // pred_region
      %59 = dma.done [#allocation4], 256
    $region17: #{tpu_custom_call.1} parent=1 // pred_fallthru
      _
    %60 = vsyncpa [#allocation3], 1
    %61 = vsyncpa [#allocation4], 1

</llo_original>
